<compile_context>
chip_gen: v7x
topology: tpu7x:2x2x1
jax: 0.10.0
libtpu: 0.0.40
codegen_flags: <defaults>
</compile_context>

<pallas_src>
import functools

import jax
import jax.numpy as jnp
from jax.experimental import pallas as pl
from jax.experimental.pallas import tpu as pltpu


def _pad(a, m):
    return -(-a // m) * m


def _col_selector(wt, d, dtype):
    """(wt*d, wt*d) one-hot lane permutation.

    Input columns are ordered (wd_j, wn, ww)  [col = wd_j*d^2 + wn*d + ww];
    output columns are ordered (wn, wd_j, ww) [col = wn*wt + wd_j*d + ww],
    i.e. one contiguous wt-wide slab per wn sub-plane.
    """
    win = wt * d
    s = jnp.arange(win)
    wn = s // wt
    r = s % wt
    src = (r // d) * (d * d) + wn * d + (r % d)          # source column per dst column
    return (jnp.arange(win)[:, None] == src[None, :]).astype(dtype)


def _downsample_kernel(x_ref, csel_ref, o_ref, *, d, cb, ht, wt,
                       compute_dtype, precision):
    # x_ref:    (1, cb, ht//d, 1, d, wt*d) -- rows already in output-H order
    #                                         for the grid-selected hn plane
    # csel_ref: (wt*d, wt*d)               -- one-hot lane permutation
    # o_ref:    (1, cb, 1, d, ht, wt)      -- the d wn-planes for these channels
    win = wt * d
    x = x_ref[...].reshape(cb * ht, win).astype(compute_dtype)
    y = jnp.dot(x, csel_ref[...], preferred_element_type=jnp.float32,
                precision=precision)
    y = y.astype(o_ref.dtype).reshape(cb, ht, win)
    for wn in range(d):          # d is small & static: d lane-dense slab stores
        o_ref[0, :, 0, wn, :, :] = y[:, :, wn * wt:(wn + 1) * wt]


def downsample(x, dilation, *, cb=None, ht=None, wt=None, vmem_limit_bytes=None):
    """Dilated space-to-depth: (B, C, H, W) -> (B, C*d^2, H/d, W/d)."""
    B, C, H, W = x.shape
    d = int(dilation)
    if d < 1:
        raise ValueError("dilation must be >= 1")
    d2 = d * d
    if H % d2 or W % d2:
        raise ValueError("H and W must be divisible by dilation**2")
    Ho, Wo = H // d, W // d
    hd = H // d2

    itm = jnp.dtype(x.dtype).itemsize
    if x.dtype == jnp.bfloat16:
        compute_dtype, precision = jnp.bfloat16, None                      # exact, native MXU
    else:
        compute_dtype, precision = jnp.float32, jax.lax.Precision.HIGHEST  # exact f32 pass-through
        # TODO(synk): integer inputs with |x| >= 2**24 lose exactness on this
        # f32 MXU path (the TPU MXU has no integer mode).
    cmp_itm = jnp.dtype(compute_dtype).itemsize

    # ---- tile selection ----------------------------------------------------
    # wt: keep the selector matmul K = N = wt*d around <= 512 so flops/element
    # (= 2*wt*d) stays well under the HBM roofline on every generation, while
    # keeping the output lane dim a multiple of 128 (or the full width).
    if wt is None:
        cap = max(128, 512 // d)
        cands = [t for t in range(Wo, 0, -1)
                 if Wo % t == 0 and t % d == 0 and (t % 128 == 0 or t == Wo)]
        wt = next((t for t in cands if t <= cap), cands[0])
    win = wt * d

    ht_cands = ([ht] if ht is not None else
                [t for t in range(Ho, 0, -1)
                 if Ho % t == 0 and t % d == 0 and (t % 8 == 0 or t == Ho)])
    cb_cands = [cb] if cb is not None else [t for t in range(C, 0, -1) if C % t == 0]

    def vmem_need(cb_, ht_):
        # Double-buffered in/out blocks (with (8,128) tile padding of the
        # small-sublane input slabs), resident selector, plus the in-kernel
        # reshaped copy / f32 matmul result / downcast copy.
        in_blk = cb_ * (ht_ // d) * _pad(d, 8) * _pad(win, 128) * itm
        out_blk = cb_ * d * _pad(ht_, 8) * _pad(wt, 128) * itm
        sel_blk = _pad(win, 8) * _pad(win, 128) * cmp_itm
        interm = _pad(cb_ * ht_, 8) * _pad(win, 128) * (cmp_itm + 4 + itm)
        return 2 * (in_blk + out_blk + sel_blk) + interm

    try:  # physical VMEM differs per generation (64 MiB on v7x, 128 MiB on v5e/v6e)
        phys = int(getattr(pltpu.get_tpu_info(), "vmem_capacity_bytes", 64 << 20))
    except Exception:
        phys = 64 << 20
    budget = (phys * 3) // 4

    if cb is None or ht is None:
        pairs = sorted(((c_, h_) for c_ in cb_cands for h_ in ht_cands),
                       key=lambda p: p[0] * p[1], reverse=True)
        fitting = [p for p in pairs if vmem_need(*p) <= budget]
        if fitting:
            # Smallest block that still moves >= ~1 MiB per grid step: big
            # enough to hit the HBM roofline, small enough to keep the grid
            # pipelined / split across 2 TCs (the hn axis alone gives >= d steps).
            big = [p for p in fitting if p[0] * p[1] * win * itm >= (1 << 20)]
            cb, ht = big[-1] if big else fitting[0]
        else:
            cb, ht = pairs[-1]

    assert C % cb == 0 and Ho % ht == 0 and Wo % wt == 0
    assert ht % d == 0 and wt % d == 0
    assert ht % 8 == 0 or ht == Ho          # (8,128) block alignment (sublanes)
    assert wt % 128 == 0 or wt == Wo        # (8,128) block alignment (lanes)

    if vmem_limit_bytes is None:
        vmem_limit_bytes = int(min(max(vmem_need(cb, ht) + (8 << 20), 32 << 20),
                                   max(budget, 32 << 20)))

    csel = _col_selector(wt, d, compute_dtype)

    steps = B * (C // cb) * d * (Ho // ht) * (Wo // wt)
    cost = pl.CostEstimate(
        flops=int(2 * steps * (cb * ht) * win * win),
        transcendentals=0,
        bytes_accessed=int(2 * x.size * itm + win * win * cmp_itm),
    )

    # Free row-major views: split H = (hd, hn, hh) on the input, and expose the
    # output channel dim as (C, hn, wn) so each grid step writes one contiguous
    # slab per (channel, wn) sub-plane.
    x6 = x.reshape(B, C, hd, d, d, W)
    out6 = pl.pallas_call(
        functools.partial(_downsample_kernel, d=d, cb=cb, ht=ht, wt=wt,
                          compute_dtype=compute_dtype, precision=precision),
        out_shape=jax.ShapeDtypeStruct((B, C, d, d, Ho, Wo), x.dtype),
        grid=(B, C // cb, d, Ho // ht, Wo // wt),
        in_specs=[
            pl.BlockSpec((1, cb, ht // d, 1, d, win),
                         lambda b, c, hn, i, j: (b, c, i, hn, 0, j)),
            pl.BlockSpec((win, win), lambda b, c, hn, i, j: (0, 0)),
        ],
        out_specs=pl.BlockSpec((1, cb, 1, d, ht, wt),
                               lambda b, c, hn, i, j: (b, c, hn, 0, i, j)),
        compiler_params=pltpu.CompilerParams(
            # Every grid point reads/writes disjoint blocks.
            dimension_semantics=("parallel",) * 5,
            vmem_limit_bytes=vmem_limit_bytes,
        ),
        cost_estimate=cost,
    )(x6, csel)
    return out6.reshape(B, C * d2, Ho, Wo)


def downsample_ref(x, d):
    """Pure-JAX reference of the einops rearranges (for verification)."""
    B, C, H, W = x.shape
    hd, wd = H // (d * d), W // (d * d)
    t = x.reshape(B, C, hd, d, d, wd, d, d)            # b c hd hn hh wd wn ww
    t = jnp.transpose(t, (0, 1, 3, 6, 2, 4, 5, 7))     # b c hn wn hd hh wd ww
    return t.reshape(B, C * d * d, hd * d, wd * d)


if __name__ == "__main__":
    # Case 1: module-spec-sized input (B, C, H, W) = (2, 4, 16, 16), dilation 2.
    B, C, H, W = 2, 4, 16, 16
    d = 2
    x = jax.random.normal(jax.random.PRNGKey(0), (B, C, H, W), dtype=jnp.float32)
    out = jax.block_until_ready(downsample(x, d))
    ref = downsample_ref(x, d)
    assert out.shape == (B, C * d * d, H // d, W // d)
    assert jnp.array_equal(out, ref), "case 1: mismatch vs reference"

    # Case 2: bf16 input, explicit channel / H tiling path.
    x2 = jax.random.normal(jax.random.PRNGKey(0), (1, 2, 32, 32), dtype=jnp.bfloat16)
    out2 = jax.block_until_ready(downsample(x2, 2, cb=1, ht=8))
    assert jnp.array_equal(out2, downsample_ref(x2, 2)), "case 2: mismatch vs reference"

    # Case 3: dilation 4 (16 sub-planes per channel).
    x3 = jax.random.normal(jax.random.PRNGKey(0), (1, 2, 16, 16), dtype=jnp.float32)
    out3 = jax.block_until_ready(downsample(x3, 4))
    assert jnp.array_equal(out3, downsample_ref(x3, 4)), "case 3: mismatch vs reference"

    print("KERNEL_OK")
</pallas_src>

<mosaic_0001>
module attributes {stable_mosaic.version = 11 : i64} {
  func.func @_downsample_kernel(%arg0: i32, %arg1: i32, %arg2: i32, %arg3: i32, %arg4: i32, %arg5: memref<1x4x4x1x2x16xf32, #tpu.memory_space<vmem>>, %arg6: memref<16x16xf32, #tpu.memory_space<vmem>>, %arg7: memref<1x4x1x2x8x8xf32, #tpu.memory_space<vmem>>) attributes {dimension_semantics = [#tpu.dimension_semantics<parallel>, #tpu.dimension_semantics<parallel>, #tpu.dimension_semantics<parallel>, #tpu.dimension_semantics<parallel>, #tpu.dimension_semantics<parallel>], iteration_bounds = array<i64: 2, 1, 2, 1, 1>, scalar_prefetch = 0 : i64, scratch_operands = 0 : i64, tpu.core_type = #tpu.core_type<tc>, window_params = [{transform_indices = @transform_0, window_bounds = array<i64: 1, 4, 4, 1, 2, 16>}, {pipeline_mode = #tpu.pipeline_mode<synchronous>, transform_indices = @transform_1, window_bounds = array<i64: 16, 16>}, {transform_indices = @transform_2, window_bounds = array<i64: 1, 4, 1, 2, 8, 8>}]} {
    %c0 = arith.constant 0 : index
    %c0_0 = arith.constant 0 : index
    %c0_1 = arith.constant 0 : index
    %c0_2 = arith.constant 0 : index
    %c0_3 = arith.constant 0 : index
    %c0_4 = arith.constant 0 : index
    %0 = vector.load %arg5[%c0, %c0_0, %c0_1, %c0_2, %c0_3, %c0_4] : memref<1x4x4x1x2x16xf32, #tpu.memory_space<vmem>>, vector<1x4x4x1x2x16xf32>
    %1 = vector.shape_cast %0 : vector<1x4x4x1x2x16xf32> to vector<32x16xf32>
    %c0_5 = arith.constant 0 : index
    %c0_6 = arith.constant 0 : index
    %2 = vector.load %arg6[%c0_5, %c0_6] : memref<16x16xf32, #tpu.memory_space<vmem>>, vector<16x16xf32>
    %cst = arith.constant dense<0.000000e+00> : vector<32x16xf32>
    %3 = tpu.matmul %1, %2, %cst {dimension_numbers = #tpu.dot_dimension_numbers<[1], [0], [0], [1], [0, 0, 1, 1], [], []>, precision = #tpu.contract_precision<fp32>} : vector<32x16xf32>, vector<16x16xf32>, vector<32x16xf32> -> vector<32x16xf32>
    %4 = vector.shape_cast %3 : vector<32x16xf32> to vector<4x8x16xf32>
    %5 = vector.extract_strided_slice %4 {offsets = [0, 0, 0], sizes = [4, 8, 8], strides = [1, 1, 1]} : vector<4x8x16xf32> to vector<4x8x8xf32>
    %c0_7 = arith.constant 0 : index
    %c0_8 = arith.constant 0 : index
    %c0_9 = arith.constant 0 : index
    %c0_10 = arith.constant 0 : index
    %c0_11 = arith.constant 0 : index
    %c0_12 = arith.constant 0 : index
    %6 = vector.load %arg7[%c0_7, %c0_8, %c0_9, %c0_10, %c0_11, %c0_12] : memref<1x4x1x2x8x8xf32, #tpu.memory_space<vmem>>, vector<1x4x1x1x8x8xf32>
    %7 = vector.shape_cast %6 : vector<1x4x1x1x8x8xf32> to vector<4x8x8xf32>
    %8 = vector.shape_cast %5 : vector<4x8x8xf32> to vector<1x4x1x1x8x8xf32>
    tpu.vector_store %arg7[%c0_7, %c0_8, %c0_9, %c0_10, %c0_11, %c0_12], %8 {strides = array<i32>} : memref<1x4x1x2x8x8xf32, #tpu.memory_space<vmem>>, vector<1x4x1x1x8x8xf32>,
    %9 = vector.extract_strided_slice %4 {offsets = [0, 0, 8], sizes = [4, 8, 8], strides = [1, 1, 1]} : vector<4x8x16xf32> to vector<4x8x8xf32>
    %c0_13 = arith.constant 0 : index
    %c0_14 = arith.constant 0 : index
    %c0_15 = arith.constant 0 : index
    %c1 = arith.constant 1 : index
    %c0_16 = arith.constant 0 : index
    %c0_17 = arith.constant 0 : index
    %10 = vector.load %arg7[%c0_13, %c0_14, %c0_15, %c1, %c0_16, %c0_17] : memref<1x4x1x2x8x8xf32, #tpu.memory_space<vmem>>, vector<1x4x1x1x8x8xf32>
    %11 = vector.shape_cast %10 : vector<1x4x1x1x8x8xf32> to vector<4x8x8xf32>
    %12 = vector.shape_cast %9 : vector<4x8x8xf32> to vector<1x4x1x1x8x8xf32>
    tpu.vector_store %arg7[%c0_13, %c0_14, %c0_15, %c1, %c0_16, %c0_17], %12 {strides = array<i32>} : memref<1x4x1x2x8x8xf32, #tpu.memory_space<vmem>>, vector<1x4x1x1x8x8xf32>,
    return
  }
  func.func @transform_0(%arg0: i32, %arg1: i32, %arg2: i32, %arg3: i32, %arg4: i32) -> (i32, i32, i32, i32, i32, i32) {
    %c0_i32 = arith.constant 0 : i32
    %c0_i32_0 = arith.constant 0 : i32
    return %arg0, %arg1, %arg3, %arg2, %c0_i32, %arg4 : i32, i32, i32, i32, i32, i32
  }
  func.func @transform_1(%arg0: i32, %arg1: i32, %arg2: i32, %arg3: i32, %arg4: i32) -> (i32, i32) {
    %c0_i32 = arith.constant 0 : i32
    %c0_i32_0 = arith.constant 0 : i32
    %c0_i32_1 = arith.constant 0 : i32
    return %c0_i32, %c0_i32_0 : i32, i32
  }
  func.func @transform_2(%arg0: i32, %arg1: i32, %arg2: i32, %arg3: i32, %arg4: i32) -> (i32, i32, i32, i32, i32, i32) {
    %c0_i32 = arith.constant 0 : i32
    %c0_i32_0 = arith.constant 0 : i32
    return %arg0, %arg1, %arg2, %c0_i32, %arg3, %arg4 : i32, i32, i32, i32, i32, i32
  }
}

</mosaic_0001>

<llo_original>
// kernel: tpu_custom_call.1
$region0: #{tpu_custom_call.1}
  #allocation0 [shape = 'u32[]', space=smem, size = 0x4, offset = 0x4, fixed_abs, tag = 'smem constant byte address 0x4 - core index']
  #allocation1 [shape = 'u32[144,128]{1,0:T(1,128)}', space=vmem, size = 0x12000, scoped, tag = 'internal scratch']
  #allocation8 [shape = 's32[]', space=sflag, size = 0x4, offset = 0, fixed_abs, tag = 'sflag constant byte address 0x0 - dummy sync flag']
  %s0 = inlined_call_operand.hbm [shape: f32[2,4,4,2,2,16], index: 0, kind: input, shape index: {}]
  %s1 = inlined_call_operand.hbm [shape: f32[16,16], index: 1, kind: input, shape index: {}]
  %s2 = inlined_call_operand.hbm [shape: f32[2,4,2,2,8,8], index: 2, kind: output, shape index: {}]
  %s3 = sld [smem:[#allocation0]]
  $region49: #{tpu_custom_call.1} parent=0
    _
  %s5 = ssub.s32 1, %s3
  %s6 = scalar_select 0, %s5, %s3
  $region1: #{tpu_custom_call.1} parent=0
    #allocation2 [shape = 'u8[32768]{0}', space=vmem, size = 0x8000, scoped, tag = 'input window, operand 0']
    #allocation3 [shape = 's32[2]{0}', space=sflag, size = 0x8, scoped, tag = 'scoped memory for tpu_custom_call.1']
    #allocation4 [shape = 's32[2]{0}', space=sflag, size = 0x8, scoped, tag = 'scoped memory for tpu_custom_call.1']
    #allocation5 [shape = 'u8[8192]{0}', space=vmem, size = 0x2000, scoped, tag = 'input window, operand 1, single buffered']
    #allocation6 [shape = 's32[1]{0}', space=sflag, size = 0x4, scoped, tag = 'scoped memory for tpu_custom_call.1']
    #allocation7 [shape = 'u8[65536]{0}', space=vmem, size = 0x10000, scoped, tag = 'output window, operand 0']
    %7 = vsyncpa [#allocation3], 0
    %s8 = scalar_lea.sflag [#allocation3], 1
    %9 = vsyncpa %s8, 0
    %10 = vsyncpa [#allocation6], 0
    %11 = vsyncpa [#allocation4], 0
    %s12 = scalar_lea.sflag [#allocation4], 1
    %13 = vsyncpa %s12, 0
    loop: start=0, step=1, limit=6
    $region2: #{tpu_custom_call.1} parent=1 // loop_pre_header
      _
    $region3: #{tpu_custom_call.1} parent=1 // loop_header
      %s15 = sphi 0, %s19
      %p16 = scmp.ge.s32.totalorder %s15, 6
      %s22 = sphi 0, %s55
      %s23 = sphi 0, %s51
      %s24 = sphi 0, %s47
      %s25 = sphi 0, %s43
      %s26 = sphi 0, %s39
      %s27 = sphi 0, %s22
      %s28 = sphi 0, %s23
      %s29 = sphi 0, %s24
      %s30 = sphi 0, %s25
      %s31 = sphi 0, %s26
      %s32 = sphi 0, %s27
      %s33 = sphi 0, %s28
      %s34 = sphi 0, %s29
      %s35 = sphi 0, %s30
      %s36 = sphi 0, %s31
      %s66 = sphi 0, %s68
      %s69 = sphi 0, %s66
      %s70 = sphi 0, %s69
      %s86 = sphi 0, %s70
      %s90 = sphi 0, %s90
      %s92 = sphi 0, %s90
      %s93 = sphi 0, %s92
      %s107 = sphi 0, %s93
      %s121 = sphi 0, %s123
      %s124 = sphi 0, %s121
      %s125 = sphi 0, %s124
      %s141 = sphi 0, %s125
    $region4: #{tpu_custom_call.1} parent=1 // loop_header_branch
      %18 = sbr.rel (%p16) target = $region8
    $region5: #{tpu_custom_call.1} parent=1 // loop_body
      %s20 = ssub.s32 %s15, 1
      %s21 = ssub.s32 %s15, 2
      %s37 = sadd.s32 1, %s26
      %p38 = scmp.ge.s32.totalorder %s37, 1
      %s39 = scalar_select %p38, 0, %s37
      %s40 = sadd.s32 1, %s25
      %s41 = scalar_select %p38, %s40, %s25
      %p42 = scmp.ge.s32.totalorder %s41, 1
      %s43 = scalar_select %p42, 0, %s41
      %s44 = sadd.s32 1, %s24
      %s45 = scalar_select %p42, %s44, %s24
      %p46 = scmp.ge.s32.totalorder %s45, 2
      %s47 = scalar_select %p46, 0, %s45
      %s48 = sadd.s32 1, %s23
      %s49 = scalar_select %p46, %s48, %s23
      %p50 = scmp.ge.s32.totalorder %s49, 1
      %s51 = scalar_select %p50, 0, %s49
      %s52 = sadd.s32 1, %s22
      %s53 = scalar_select %p50, %s52, %s22
      %p54 = scmp.ge.s32.totalorder %s53, 2
      %s55 = scalar_select %p54, 0, %s53
      %s56 = ssub.s32 %s22, %s55
      %s57 = ssub.s32 %s23, %s51
      %s58 = sor.u32 %s56, %s57
      %s59 = ssub.s32 %s25, %s43
      %s60 = sor.u32 %s58, %s59
      %s61 = ssub.s32 %s24, %s47
      %s62 = sor.u32 %s60, %s61
      %s63 = ssub.s32 %s26, %s39
      %s64 = sor.u32 %s62, %s63
      %p65 = scmp.eq.s32.totalorder %s64, 0
      %s67 = sadd.s32 %s66, 1
      %s68 = scalar_select %p65, %s66, %s67
      %p71 = pneg %p65
      %p72 = scmp.eq.s32.totalorder %s15, 3
      %p73 = por %p71, %p72
      %p74 = scmp.ne.s32.totalorder %s66, %s69
      %p75 = scmp.eq.s32.totalorder %s15, 0
      %p76 = por %p74, %p75
      %p77 = scmp.ne.s32.totalorder %s66, %s69
      %p78 = scmp.eq.s32.totalorder %s20, 3
      %p79 = por %p77, %p78
      %p80 = scmp.ne.s32.totalorder %s69, %s70
      %p81 = scmp.eq.s32.totalorder %s20, 0
      %p82 = por %p80, %p81
      %p83 = scmp.ne.s32.totalorder %s69, %s70
      %p84 = scmp.eq.s32.totalorder %s21, 3
      %p85 = por %p83, %p84
      %p87 = scmp.ne.s32.totalorder %s70, %s86
      %p88 = scmp.eq.s32.totalorder %s21, 0
      %p89 = por %p87, %p88
      %s91 = sadd.s32 %s90, 1
      %p94 = scmp.eq.s32.totalorder %s15, 3
      %p95 = scmp.ne.s32.totalorder %s90, %s92
      %p96 = scmp.eq.s32.totalorder %s15, 0
      %p97 = por %p95, %p96
      %p98 = scmp.ne.s32.totalorder %s90, %s92
      %p99 = scmp.eq.s32.totalorder %s20, 3
      %p100 = por %p98, %p99
      %p101 = scmp.ne.s32.totalorder %s92, %s93
      %p102 = scmp.eq.s32.totalorder %s20, 0
      %p103 = por %p101, %p102
      %p104 = scmp.ne.s32.totalorder %s92, %s93
      %p105 = scmp.eq.s32.totalorder %s21, 3
      %p106 = por %p104, %p105
      %p108 = scmp.ne.s32.totalorder %s93, %s107
      %p109 = scmp.eq.s32.totalorder %s21, 0
      %p110 = por %p108, %p109
      %s111 = ssub.s32 %s22, %s55
      %s112 = ssub.s32 %s23, %s51
      %s113 = sor.u32 %s111, %s112
      %s114 = ssub.s32 %s24, %s47
      %s115 = sor.u32 %s113, %s114
      %s116 = ssub.s32 %s25, %s43
      %s117 = sor.u32 %s115, %s116
      %s118 = ssub.s32 %s26, %s39
      %s119 = sor.u32 %s117, %s118
      %p120 = scmp.eq.s32.totalorder %s119, 0
      %s122 = sadd.s32 %s121, 1
      %s123 = scalar_select %p120, %s121, %s122
      %p126 = pneg %p120
      %p127 = scmp.eq.s32.totalorder %s15, 3
      %p128 = por %p126, %p127
      %p129 = scmp.ne.s32.totalorder %s121, %s124
      %p130 = scmp.eq.s32.totalorder %s15, 0
      %p131 = por %p129, %p130
      %p132 = scmp.ne.s32.totalorder %s121, %s124
      %p133 = scmp.eq.s32.totalorder %s20, 3
      %p134 = por %p132, %p133
      %p135 = scmp.ne.s32.totalorder %s124, %s125
      %p136 = scmp.eq.s32.totalorder %s20, 0
      %p137 = por %p135, %p136
      %p138 = scmp.ne.s32.totalorder %s124, %s125
      %p139 = scmp.eq.s32.totalorder %s21, 3
      %p140 = por %p138, %p139
      %p142 = scmp.ne.s32.totalorder %s125, %s141
      %p143 = scmp.eq.s32.totalorder %s21, 0
      %p144 = por %p142, %p143
      %p145 = scmp.le.s32.totalorder 1, %s15
      %p146 = scmp.lt.s32.totalorder %s15, 5
      %p147 = pnand %p145, %p146
      %p148 = pneg %p147
      // Predicated region
      $region9: #{tpu_custom_call.1} parent=5 // pred_check
        _
      $region10: #{tpu_custom_call.1} parent=5 // pred_check_branch
        %150 = sbr.rel (%p147) target = $region12
      $region11: #{tpu_custom_call.1} parent=5 // pred_region
        %s151 = ssub.s32 %s15, 1
        // Predicated region
        $region13: #{tpu_custom_call.1} parent=11 // pred_check
          %p152 = pneg %p103
        $region14: #{tpu_custom_call.1} parent=11 // pred_check_branch
          %154 = sbr.rel (%p152) target = $region16
        $region15: #{tpu_custom_call.1} parent=11 // pred_region
          %s156 = ssub.s32 256, 256
          %157 = vsyncadd [#allocation6], %s156
          %s158 = sshll.u32 [#allocation5], 4
          %s159 = int_to_ptr.vmem [resolvable:$true] %s158
          %164 = dma.hbm_to_vmem [thread:$0]  %s1, 256, %s159, [#allocation6], 128, 128, 8
        $region16: #{tpu_custom_call.1} parent=11 // pred_fallthru
          _
      $region12: #{tpu_custom_call.1} parent=5 // pred_fallthru
        _
      %p165 = scmp.lt.s32.totalorder %s15, 4
      // Predicated region
      $region17: #{tpu_custom_call.1} parent=5 // pred_check
        %p166 = pneg %p165
      $region18: #{tpu_custom_call.1} parent=5 // pred_check_branch
        %168 = sbr.rel (%p166) target = $region20
      $region19: #{tpu_custom_call.1} parent=5 // pred_region
        // Predicated region
        $region21: #{tpu_custom_call.1} parent=19 // pred_check
          %p169 = pneg %p76
        $region22: #{tpu_custom_call.1} parent=19 // pred_check_branch
          %171 = sbr.rel (%p169) target = $region24
        $region23: #{tpu_custom_call.1} parent=19 // pred_region
          %s172 = sand.u32 %s66, 1
          %s173 = scalar_lea.sflag [#allocation3], %s172
          %s174 = sand.u32 %s66, 1
          %s175 = smul.addr %s174, 32
          %s176 = scalar_lea.vmem [#allocation2], %s175
          %s177 = smul.u32 4, %s23
          %s178 = smul.u32 4, %s25
          %s180 = ssub.s32 512, 512
          %181 = vsyncadd %s173, %s180
          %s182 = sadd.s32 %s26, %s24
          %s183 = smul.addr %s178, 2
          %s184 = sadd.s32 %s182, %s183
          %s185 = smul.addr %s177, 8
          %s186 = sadd.s32 %s184, %s185
          %s187 = smul.addr %s22, 32
          %s188 = sadd.s32 %s186, %s187
          %s189 = smul.addr %s188, 32
          %s190 = scalar_lea.hbm %s0, %s189
          %s191 = sshll.u32 %s176, 4
          %s192 = int_to_ptr.vmem [resolvable:$true] %s191
          %197 = dma.hbm_to_vmem [thread:$0]  %s190, 512, %s192, %s173, 64, 32, 2
        $region24: #{tpu_custom_call.1} parent=19 // pred_fallthru
          _
      $region20: #{tpu_custom_call.1} parent=5 // pred_fallthru
        _
      %p198 = scmp.le.s32.totalorder 1, %s15
      %p199 = scmp.lt.s32.totalorder %s15, 5
      %p200 = pnand %p198, %p199
      %p201 = pneg %p200
      // Predicated region
      $region25: #{tpu_custom_call.1} parent=5 // pred_check
        _
      $region26: #{tpu_custom_call.1} parent=5 // pred_check_branch
        %203 = sbr.rel (%p200) target = $region28
      $region27: #{tpu_custom_call.1} parent=5 // pred_region
        %s204 = ssub.s32 %s15, 1
        %s205 = sand.u32 %s69, 1
        %s206 = scalar_lea.sflag [#allocation3], %s205
        %s207 = sand.u32 %s69, 1
        %s208 = smul.addr %s207, 32
        %s209 = scalar_lea.vmem [#allocation2], %s208
        // Predicated region
        $region29: #{tpu_custom_call.1} parent=27 // pred_check
          %p210 = pneg %p82
        $region30: #{tpu_custom_call.1} parent=27 // pred_check_branch
          %212 = sbr.rel (%p210) target = $region32
        $region31: #{tpu_custom_call.1} parent=27 // pred_region
          %213 = dma.done %s206, 512
        $region32: #{tpu_custom_call.1} parent=27 // pred_fallthru
          _
        // Predicated region
        $region33: #{tpu_custom_call.1} parent=27 // pred_check
          %p214 = pneg %p103
        $region34: #{tpu_custom_call.1} parent=27 // pred_check_branch
          %216 = sbr.rel (%p214) target = $region36
        $region35: #{tpu_custom_call.1} parent=27 // pred_region
          %217 = dma.done [#allocation6], 256
        $region36: #{tpu_custom_call.1} parent=27 // pred_fallthru
          _
        %s218 = sand.u32 %s69, 1
        %s219 = scalar_lea.sflag [#allocation3], %s218
        %s220 = sand.u32 %s69, 1
        %s221 = smul.addr %s220, 32
        %s222 = scalar_lea.vmem [#allocation2], %s221
        %p223 = pneg %p82
        %p224 = pneg %p79
        %p225 = pneg %p103
        %p226 = pneg %p100
        %p227 = pneg %p137
        %p228 = pneg %p134
        %s229 = sand.u32 %s124, 1
        %s230 = scalar_lea.sflag [#allocation4], %s229
        %s231 = sand.u32 %s124, 1
        %s232 = smul.addr %s231, 64
        %s233 = scalar_lea.vmem [#allocation7], %s232
        %s234 = smul.u32 4, %s28
        %s235 = smul.u32 4, %s30
        %s236 = smul.u32 4, %s28
        %v237 = vld [vmem:[%s209] sm:$0x3]
        %v238 = vld [vmem:[%s209 + $0x2] sm:$0x3]
        %v239 = vld [vmem:[%s209 + $0x4] sm:$0x3]
        %v240 = vld [vmem:[%s209 + $0x6] sm:$0x3]
        %v241 = vld [vmem:[%s209 + $0x8] sm:$0x3]
        %v242 = vld [vmem:[%s209 + $0xa] sm:$0x3]
        %v243 = vld [vmem:[%s209 + $0xc] sm:$0x3]
        %v244 = vld [vmem:[%s209 + $0xe] sm:$0x3]
        %v245 = vld [vmem:[%s209 + $0x10] sm:$0x3]
        %v246 = vld [vmem:[%s209 + $0x12] sm:$0x3]
        %v247 = vld [vmem:[%s209 + $0x14] sm:$0x3]
        %v248 = vld [vmem:[%s209 + $0x16] sm:$0x3]
        %v249 = vld [vmem:[%s209 + $0x18] sm:$0x3]
        %v250 = vld [vmem:[%s209 + $0x1a] sm:$0x3]
        %v251 = vld [vmem:[%s209 + $0x1c] sm:$0x3]
        %v252 = vld [vmem:[%s209 + $0x1e] sm:$0x3]
        %v253 = vld [vmem:[#allocation5] sm:$0xff]
        %v254 = vld [vmem:[#allocation5 + $0x8] sm:$0xff]
        %v271 = vcombine.low %v237, %v238
        %v272 = vcombine.low %v239, %v240
        %v274 = vunpack.c.l.s4 1983009808
        %v275 = vunpack.c.0.s8 %v274
        %v276 = vlaneseq
        %v277 = vshrl.u32 %v276, 7
        %v278 = vsub.s32 %v275, %v277
        %v279 = vrot.slane %v271, %v278
        %v281 = vunpack.c.l.s4 1983009808
        %v282 = vunpack.c.0.s8 %v281
        %v283 = vlaneseq
        %v284 = vshrl.u32 %v283, 7
        %v285 = vsub.s32 %v282, %v284
        %v286 = vrot.slane %v272, %v285
        %v287 = vcombine.low %v279, %v286
        %v288 = vcombine.low %v241, %v242
        %v289 = vcombine.low %v243, %v244
        %v291 = vunpack.c.l.s4 1983009808
        %v292 = vunpack.c.0.s8 %v291
        %v293 = vlaneseq
        %v294 = vshrl.u32 %v293, 7
        %v295 = vsub.s32 %v292, %v294
        %v296 = vrot.slane %v288, %v295
        %v298 = vunpack.c.l.s4 1983009808
        %v299 = vunpack.c.0.s8 %v298
        %v300 = vlaneseq
        %v301 = vshrl.u32 %v300, 7
        %v302 = vsub.s32 %v299, %v301
        %v303 = vrot.slane %v289, %v302
        %v304 = vcombine.low %v296, %v303
        %v305 = vcombine.low %v245, %v246
        %v306 = vcombine.low %v247, %v248
        %v308 = vunpack.c.l.s4 1983009808
        %v309 = vunpack.c.0.s8 %v308
        %v310 = vlaneseq
        %v311 = vshrl.u32 %v310, 7
        %v312 = vsub.s32 %v309, %v311
        %v313 = vrot.slane %v305, %v312
        %v315 = vunpack.c.l.s4 1983009808
        %v316 = vunpack.c.0.s8 %v315
        %v317 = vlaneseq
        %v318 = vshrl.u32 %v317, 7
        %v319 = vsub.s32 %v316, %v318
        %v320 = vrot.slane %v306, %v319
        %v321 = vcombine.low %v313, %v320
        %v322 = vcombine.low %v249, %v250
        %v323 = vcombine.low %v251, %v252
        %v325 = vunpack.c.l.s4 1983009808
        %v326 = vunpack.c.0.s8 %v325
        %v327 = vlaneseq
        %v328 = vshrl.u32 %v327, 7
        %v329 = vsub.s32 %v326, %v328
        %v330 = vrot.slane %v322, %v329
        %v332 = vunpack.c.l.s4 1983009808
        %v333 = vunpack.c.0.s8 %v332
        %v334 = vlaneseq
        %v335 = vshrl.u32 %v334, 7
        %v336 = vsub.s32 %v333, %v335
        %v337 = vrot.slane %v323, %v336
        %v338 = vcombine.low %v330, %v337
        %vm339 = vcmask 130048
        %v340 = vsel %vm339, %v287, 0
        %v342 = vsel %vm339, %v304, 0
        %v344 = vsel %vm339, %v321, 0
        %v346 = vsel %vm339, %v338, 0
        %348 = vmatprep.subr.mxu0 0.0
        %v349 = vand.u32 %v253, 4294901760
        %350 = vmatpush1.msra.mxu0 %v349
        %351 = vmatprep.subr.mxu0 0.0
        %v352 = vand.u32 %v254, 4294901760
        %353 = vmatpush1.msra.mxu0 %v352
        %354 = vmatprep.subr.mxu0 0.0
        %355 = vmatpush1.msra.mxu0 0.0
        %356 = vmatprep.subr.mxu0 0.0
        %357 = vmatpush1.msra.mxu0 0.0
        %358 = vmatprep.subr.mxu0 0.0
        %359 = vmatpush1.msra.mxu0 0.0
        %360 = vmatprep.subr.mxu0 0.0
        %361 = vmatpush1.msra.mxu0 0.0
        %362 = vmatprep.subr.mxu0 0.0
        %363 = vmatpush1.msra.mxu0 0.0
        %364 = vmatprep.subr.mxu0 0.0
        %365 = vmatpush1.msra.mxu0 0.0
        %366 = vmatprep.subr.mxu0 0.0
        %367 = vmatpush1.msra.mxu0 0.0
        %368 = vmatprep.subr.mxu0 0.0
        %369 = vmatpush1.msra.mxu0 0.0
        %370 = vmatprep.subr.mxu0 0.0
        %371 = vmatpush1.msra.mxu0 0.0
        %372 = vmatprep.subr.mxu0 0.0
        %373 = vmatpush1.msra.mxu0 0.0
        %374 = vmatprep.subr.mxu0 0.0
        %375 = vmatpush1.msra.mxu0 0.0
        %376 = vmatprep.subr.mxu0 0.0
        %377 = vmatpush1.msra.mxu0 0.0
        %378 = vmatprep.subr.mxu0 0.0
        %379 = vmatpush1.msra.mxu0 0.0
        %380 = vmatprep.subr.mxu0 0.0
        %381 = vmatpush1.msra.mxu0 0.0
        %382 = vmatprep.subr.mxu0 0.0
        %383 = vmatpush1.msra.mxu0 0.0
        %384 = vmatprep.subr.mxu0 0.0
        %385 = vmatpush1.msra.mxu0 0.0
        %386 = vmatprep.subr.mxu0 0.0
        %387 = vmatpush1.msra.mxu0 0.0
        %388 = vmatprep.subr.mxu0 0.0
        %389 = vmatpush1.msra.mxu0 0.0
        %390 = vmatprep.subr.mxu0 0.0
        %391 = vmatpush1.msra.mxu0 0.0
        %392 = vmatprep.subr.mxu0 0.0
        %393 = vmatpush1.msra.mxu0 0.0
        %394 = vmatprep.subr.mxu0 0.0
        %395 = vmatpush1.msra.mxu0 0.0
        %396 = vmatprep.subr.mxu0 0.0
        %397 = vmatpush1.msra.mxu0 0.0
        %398 = vmatprep.subr.mxu0 0.0
        %399 = vmatpush1.msra.mxu0 0.0
        %400 = vmatprep.subr.mxu0 0.0
        %401 = vmatpush1.msra.mxu0 0.0
        %402 = vmatprep.subr.mxu0 0.0
        %403 = vmatpush1.msra.mxu0 0.0
        %404 = vmatprep.subr.mxu0 0.0
        %405 = vmatpush1.msra.mxu0 0.0
        %406 = vmatprep.subr.mxu0 0.0
        %407 = vmatpush1.msra.mxu0 0.0
        %408 = vmatprep.subr.mxu0 0.0
        %409 = vmatpush1.msra.mxu0 0.0
        %410 = vmatprep.subr.mxu0 0.0
        %411 = vmatpush1.msra.mxu0 0.0
        %412 = vmatprep.subr.mxu0 0.0
        %413 = vmatpush1.msra.mxu0 0.0
        %414 = vmatprep.mubr.f32.mxu0 0.0
        %v415 = vand.u32 %v340, 4294901760
        %v416 = vsub.f32 %v340, %v415
        %v417 = vand.u32 %v416, 4294901760
        %v418 = vsub.f32 %v416, %v417
        %v419 = vand.u32 %v418, 4294901760
        %420 = vmatmul.mubr.f32.gmra.mrb[0].mxu0 %v419
        %v421 = vpop.f32.mrb[0].mxu0
        %v422 = vadd.f32 0.0, %v421
        %v423 = vpop.f32.mrb[0].mxu0
        %424 = vmatprep.mubr.f32.mxu0 0.0
        %v425 = vand.u32 %v342, 4294901760
        %v426 = vsub.f32 %v342, %v425
        %v427 = vand.u32 %v426, 4294901760
        %v428 = vsub.f32 %v426, %v427
        %v429 = vand.u32 %v428, 4294901760
        %430 = vmatmul.mubr.f32.gmra.mrb[0].mxu0 %v429
        %v431 = vpop.f32.mrb[0].mxu0
        %v432 = vadd.f32 0.0, %v431
        %v433 = vpop.f32.mrb[0].mxu0
        %434 = vmatprep.mubr.f32.mxu0 0.0
        %v435 = vand.u32 %v344, 4294901760
        %v436 = vsub.f32 %v344, %v435
        %v437 = vand.u32 %v436, 4294901760
        %v438 = vsub.f32 %v436, %v437
        %v439 = vand.u32 %v438, 4294901760
        %440 = vmatmul.mubr.f32.gmra.mrb[0].mxu0 %v439
        %v441 = vpop.f32.mrb[0].mxu0
        %v442 = vadd.f32 0.0, %v441
        %v443 = vpop.f32.mrb[0].mxu0
        %444 = vmatprep.mubr.f32.mxu0 0.0
        %v445 = vand.u32 %v346, 4294901760
        %v446 = vsub.f32 %v346, %v445
        %v447 = vand.u32 %v446, 4294901760
        %v448 = vsub.f32 %v446, %v447
        %v449 = vand.u32 %v448, 4294901760
        %450 = vmatmul.mubr.f32.gmra.mrb[0].mxu0 %v449
        %v451 = vpop.f32.mrb[0].mxu0
        %v452 = vadd.f32 0.0, %v451
        %v453 = vpop.f32.mrb[0].mxu0
        %454 = vdwg.mxu0
        %455 = vmatprep.subr.mxu0 0.0
        %v456 = vand.u32 %v253, 4294901760
        %v457 = vsub.f32 %v253, %v456
        %v458 = vand.u32 %v457, 4294901760
        %v459 = vsub.f32 %v457, %v458
        %v460 = vand.u32 %v459, 4294901760
        %461 = vmatpush1.msra.mxu0 %v460
        %462 = vmatprep.subr.mxu0 0.0
        %v463 = vand.u32 %v254, 4294901760
        %v464 = vsub.f32 %v254, %v463
        %v465 = vand.u32 %v464, 4294901760
        %v466 = vsub.f32 %v464, %v465
        %v467 = vand.u32 %v466, 4294901760
        %468 = vmatpush1.msra.mxu0 %v467
        %469 = vmatprep.subr.mxu0 0.0
        %470 = vmatpush1.msra.mxu0 0.0
        %471 = vmatprep.subr.mxu0 0.0
        %472 = vmatpush1.msra.mxu0 0.0
        %473 = vmatprep.subr.mxu0 0.0
        %474 = vmatpush1.msra.mxu0 0.0
        %475 = vmatprep.subr.mxu0 0.0
        %476 = vmatpush1.msra.mxu0 0.0
        %477 = vmatprep.subr.mxu0 0.0
        %478 = vmatpush1.msra.mxu0 0.0
        %479 = vmatprep.subr.mxu0 0.0
        %480 = vmatpush1.msra.mxu0 0.0
        %481 = vmatprep.subr.mxu0 0.0
        %482 = vmatpush1.msra.mxu0 0.0
        %483 = vmatprep.subr.mxu0 0.0
        %484 = vmatpush1.msra.mxu0 0.0
        %485 = vmatprep.subr.mxu0 0.0
        %486 = vmatpush1.msra.mxu0 0.0
        %487 = vmatprep.subr.mxu0 0.0
        %488 = vmatpush1.msra.mxu0 0.0
        %489 = vmatprep.subr.mxu0 0.0
        %490 = vmatpush1.msra.mxu0 0.0
        %491 = vmatprep.subr.mxu0 0.0
        %492 = vmatpush1.msra.mxu0 0.0
        %493 = vmatprep.subr.mxu0 0.0
        %494 = vmatpush1.msra.mxu0 0.0
        %495 = vmatprep.subr.mxu0 0.0
        %496 = vmatpush1.msra.mxu0 0.0
        %497 = vmatprep.subr.mxu0 0.0
        %498 = vmatpush1.msra.mxu0 0.0
        %499 = vmatprep.subr.mxu0 0.0
        %500 = vmatpush1.msra.mxu0 0.0
        %501 = vmatprep.subr.mxu0 0.0
        %502 = vmatpush1.msra.mxu0 0.0
        %503 = vmatprep.subr.mxu0 0.0
        %504 = vmatpush1.msra.mxu0 0.0
        %505 = vmatprep.subr.mxu0 0.0
        %506 = vmatpush1.msra.mxu0 0.0
        %507 = vmatprep.subr.mxu0 0.0
        %508 = vmatpush1.msra.mxu0 0.0
        %509 = vmatprep.subr.mxu0 0.0
        %510 = vmatpush1.msra.mxu0 0.0
        %511 = vmatprep.subr.mxu0 0.0
        %512 = vmatpush1.msra.mxu0 0.0
        %513 = vmatprep.subr.mxu0 0.0
        %514 = vmatpush1.msra.mxu0 0.0
        %515 = vmatprep.subr.mxu0 0.0
        %516 = vmatpush1.msra.mxu0 0.0
        %517 = vmatprep.subr.mxu0 0.0
        %518 = vmatpush1.msra.mxu0 0.0
        %519 = vmatprep.subr.mxu0 0.0
        %520 = vmatpush1.msra.mxu0 0.0
        %521 = vmatprep.subr.mxu0 0.0
        %522 = vmatpush1.msra.mxu0 0.0
        %523 = vmatprep.subr.mxu0 0.0
        %524 = vmatpush1.msra.mxu0 0.0
        %525 = vmatprep.subr.mxu0 0.0
        %526 = vmatpush1.msra.mxu0 0.0
        %527 = vmatprep.subr.mxu0 0.0
        %528 = vmatpush1.msra.mxu0 0.0
        %529 = vmatprep.mubr.f32.mxu0 0.0
        %v530 = vand.u32 %v340, 4294901760
        %531 = vmatmul.mubr.f32.gmra.mrb[0].mxu0 %v530
        %v532 = vpop.f32.mrb[0].mxu0
        %v533 = vadd.f32 %v422, %v532
        %v534 = vpop.f32.mrb[0].mxu0
        %535 = vmatprep.mubr.f32.mxu0 0.0
        %v536 = vand.u32 %v342, 4294901760
        %537 = vmatmul.mubr.f32.gmra.mrb[0].mxu0 %v536
        %v538 = vpop.f32.mrb[0].mxu0
        %v539 = vadd.f32 %v432, %v538
        %v540 = vpop.f32.mrb[0].mxu0
        %541 = vmatprep.mubr.f32.mxu0 0.0
        %v542 = vand.u32 %v344, 4294901760
        %543 = vmatmul.mubr.f32.gmra.mrb[0].mxu0 %v542
        %v544 = vpop.f32.mrb[0].mxu0
        %v545 = vadd.f32 %v442, %v544
        %v546 = vpop.f32.mrb[0].mxu0
        %547 = vmatprep.mubr.f32.mxu0 0.0
        %v548 = vand.u32 %v346, 4294901760
        %549 = vmatmul.mubr.f32.gmra.mrb[0].mxu0 %v548
        %v550 = vpop.f32.mrb[0].mxu0
        %v551 = vadd.f32 %v452, %v550
        %v552 = vpop.f32.mrb[0].mxu0
        %553 = vdwg.mxu0
        %554 = vmatprep.subr.mxu0 0.0
        %v555 = vand.u32 %v253, 4294901760
        %v556 = vsub.f32 %v253, %v555
        %557 = vmatpush1.msra.mxu0 %v556
        %558 = vmatprep.subr.mxu0 0.0
        %v559 = vand.u32 %v254, 4294901760
        %v560 = vsub.f32 %v254, %v559
        %561 = vmatpush1.msra.mxu0 %v560
        %562 = vmatprep.subr.mxu0 0.0
        %563 = vmatpush1.msra.mxu0 0.0
        %564 = vmatprep.subr.mxu0 0.0
        %565 = vmatpush1.msra.mxu0 0.0
        %566 = vmatprep.subr.mxu0 0.0
        %567 = vmatpush1.msra.mxu0 0.0
        %568 = vmatprep.subr.mxu0 0.0
        %569 = vmatpush1.msra.mxu0 0.0
        %570 = vmatprep.subr.mxu0 0.0
        %571 = vmatpush1.msra.mxu0 0.0
        %572 = vmatprep.subr.mxu0 0.0
        %573 = vmatpush1.msra.mxu0 0.0
        %574 = vmatprep.subr.mxu0 0.0
        %575 = vmatpush1.msra.mxu0 0.0
        %576 = vmatprep.subr.mxu0 0.0
        %577 = vmatpush1.msra.mxu0 0.0
        %578 = vmatprep.subr.mxu0 0.0
        %579 = vmatpush1.msra.mxu0 0.0
        %580 = vmatprep.subr.mxu0 0.0
        %581 = vmatpush1.msra.mxu0 0.0
        %582 = vmatprep.subr.mxu0 0.0
        %583 = vmatpush1.msra.mxu0 0.0
        %584 = vmatprep.subr.mxu0 0.0
        %585 = vmatpush1.msra.mxu0 0.0
        %586 = vmatprep.subr.mxu0 0.0
        %587 = vmatpush1.msra.mxu0 0.0
        %588 = vmatprep.subr.mxu0 0.0
        %589 = vmatpush1.msra.mxu0 0.0
        %590 = vmatprep.subr.mxu0 0.0
        %591 = vmatpush1.msra.mxu0 0.0
        %592 = vmatprep.subr.mxu0 0.0
        %593 = vmatpush1.msra.mxu0 0.0
        %594 = vmatprep.subr.mxu0 0.0
        %595 = vmatpush1.msra.mxu0 0.0
        %596 = vmatprep.subr.mxu0 0.0
        %597 = vmatpush1.msra.mxu0 0.0
        %598 = vmatprep.subr.mxu0 0.0
        %599 = vmatpush1.msra.mxu0 0.0
        %600 = vmatprep.subr.mxu0 0.0
        %601 = vmatpush1.msra.mxu0 0.0
        %602 = vmatprep.subr.mxu0 0.0
        %603 = vmatpush1.msra.mxu0 0.0
        %604 = vmatprep.subr.mxu0 0.0
        %605 = vmatpush1.msra.mxu0 0.0
        %606 = vmatprep.subr.mxu0 0.0
        %607 = vmatpush1.msra.mxu0 0.0
        %608 = vmatprep.subr.mxu0 0.0
        %609 = vmatpush1.msra.mxu0 0.0
        %610 = vmatprep.subr.mxu0 0.0
        %611 = vmatpush1.msra.mxu0 0.0
        %612 = vmatprep.subr.mxu0 0.0
        %613 = vmatpush1.msra.mxu0 0.0
        %614 = vmatprep.subr.mxu0 0.0
        %615 = vmatpush1.msra.mxu0 0.0
        %616 = vmatprep.subr.mxu0 0.0
        %617 = vmatpush1.msra.mxu0 0.0
        %618 = vmatprep.subr.mxu0 0.0
        %619 = vmatpush1.msra.mxu0 0.0
        %620 = vmatprep.subr.mxu0 0.0
        %621 = vmatpush1.msra.mxu0 0.0
        %622 = vmatprep.mubr.f32.mxu0 0.0
        %v623 = vand.u32 %v340, 4294901760
        %v624 = vsub.f32 %v340, %v623
        %625 = vmatmul.mubr.f32.gmra.mrb[0].mxu0 %v624
        %v626 = vpop.f32.mrb[0].mxu0
        %v627 = vadd.f32 %v533, %v626
        %v628 = vpop.f32.mrb[0].mxu0
        %629 = vmatprep.mubr.f32.mxu0 0.0
        %v630 = vand.u32 %v342, 4294901760
        %v631 = vsub.f32 %v342, %v630
        %632 = vmatmul.mubr.f32.gmra.mrb[0].mxu0 %v631
        %v633 = vpop.f32.mrb[0].mxu0
        %v634 = vadd.f32 %v539, %v633
        %v635 = vpop.f32.mrb[0].mxu0
        %636 = vmatprep.mubr.f32.mxu0 0.0
        %v637 = vand.u32 %v344, 4294901760
        %v638 = vsub.f32 %v344, %v637
        %639 = vmatmul.mubr.f32.gmra.mrb[0].mxu0 %v638
        %v640 = vpop.f32.mrb[0].mxu0
        %v641 = vadd.f32 %v545, %v640
        %v642 = vpop.f32.mrb[0].mxu0
        %643 = vmatprep.mubr.f32.mxu0 0.0
        %v644 = vand.u32 %v346, 4294901760
        %v645 = vsub.f32 %v346, %v644
        %646 = vmatmul.mubr.f32.gmra.mrb[0].mxu0 %v645
        %v647 = vpop.f32.mrb[0].mxu0
        %v648 = vadd.f32 %v551, %v647
        %v649 = vpop.f32.mrb[0].mxu0
        %650 = vdwg.mxu0
        %651 = vmatprep.subr.mxu0 0.0
        %v652 = vand.u32 %v253, 4294901760
        %653 = vmatpush1.msra.mxu0 %v652
        %654 = vmatprep.subr.mxu0 0.0
        %v655 = vand.u32 %v254, 4294901760
        %656 = vmatpush1.msra.mxu0 %v655
        %657 = vmatprep.subr.mxu0 0.0
        %658 = vmatpush1.msra.mxu0 0.0
        %659 = vmatprep.subr.mxu0 0.0
        %660 = vmatpush1.msra.mxu0 0.0
        %661 = vmatprep.subr.mxu0 0.0
        %662 = vmatpush1.msra.mxu0 0.0
        %663 = vmatprep.subr.mxu0 0.0
        %664 = vmatpush1.msra.mxu0 0.0
        %665 = vmatprep.subr.mxu0 0.0
        %666 = vmatpush1.msra.mxu0 0.0
        %667 = vmatprep.subr.mxu0 0.0
        %668 = vmatpush1.msra.mxu0 0.0
        %669 = vmatprep.subr.mxu0 0.0
        %670 = vmatpush1.msra.mxu0 0.0
        %671 = vmatprep.subr.mxu0 0.0
        %672 = vmatpush1.msra.mxu0 0.0
        %673 = vmatprep.subr.mxu0 0.0
        %674 = vmatpush1.msra.mxu0 0.0
        %675 = vmatprep.subr.mxu0 0.0
        %676 = vmatpush1.msra.mxu0 0.0
        %677 = vmatprep.subr.mxu0 0.0
        %678 = vmatpush1.msra.mxu0 0.0
        %679 = vmatprep.subr.mxu0 0.0
        %680 = vmatpush1.msra.mxu0 0.0
        %681 = vmatprep.subr.mxu0 0.0
        %682 = vmatpush1.msra.mxu0 0.0
        %683 = vmatprep.subr.mxu0 0.0
        %684 = vmatpush1.msra.mxu0 0.0
        %685 = vmatprep.subr.mxu0 0.0
        %686 = vmatpush1.msra.mxu0 0.0
        %687 = vmatprep.subr.mxu0 0.0
        %688 = vmatpush1.msra.mxu0 0.0
        %689 = vmatprep.subr.mxu0 0.0
        %690 = vmatpush1.msra.mxu0 0.0
        %691 = vmatprep.subr.mxu0 0.0
        %692 = vmatpush1.msra.mxu0 0.0
        %693 = vmatprep.subr.mxu0 0.0
        %694 = vmatpush1.msra.mxu0 0.0
        %695 = vmatprep.subr.mxu0 0.0
        %696 = vmatpush1.msra.mxu0 0.0
        %697 = vmatprep.subr.mxu0 0.0
        %698 = vmatpush1.msra.mxu0 0.0
        %699 = vmatprep.subr.mxu0 0.0
        %700 = vmatpush1.msra.mxu0 0.0
        %701 = vmatprep.subr.mxu0 0.0
        %702 = vmatpush1.msra.mxu0 0.0
        %703 = vmatprep.subr.mxu0 0.0
        %704 = vmatpush1.msra.mxu0 0.0
        %705 = vmatprep.subr.mxu0 0.0
        %706 = vmatpush1.msra.mxu0 0.0
        %707 = vmatprep.subr.mxu0 0.0
        %708 = vmatpush1.msra.mxu0 0.0
        %709 = vmatprep.subr.mxu0 0.0
        %710 = vmatpush1.msra.mxu0 0.0
        %711 = vmatprep.subr.mxu0 0.0
        %712 = vmatpush1.msra.mxu0 0.0
        %713 = vmatprep.subr.mxu0 0.0
        %714 = vmatpush1.msra.mxu0 0.0
        %715 = vmatprep.subr.mxu0 0.0
        %716 = vmatpush1.msra.mxu0 0.0
        %717 = vmatprep.mubr.f32.mxu0 0.0
        %v718 = vand.u32 %v340, 4294901760
        %v719 = vsub.f32 %v340, %v718
        %v720 = vand.u32 %v719, 4294901760
        %721 = vmatmul.mubr.f32.gmra.mrb[0].mxu0 %v720
        %v722 = vpop.f32.mrb[0].mxu0
        %v723 = vadd.f32 %v627, %v722
        %v724 = vpop.f32.mrb[0].mxu0
        %725 = vmatprep.mubr.f32.mxu0 0.0
        %v726 = vand.u32 %v342, 4294901760
        %v727 = vsub.f32 %v342, %v726
        %v728 = vand.u32 %v727, 4294901760
        %729 = vmatmul.mubr.f32.gmra.mrb[0].mxu0 %v728
        %v730 = vpop.f32.mrb[0].mxu0
        %v731 = vadd.f32 %v634, %v730
        %v732 = vpop.f32.mrb[0].mxu0
        %733 = vmatprep.mubr.f32.mxu0 0.0
        %v734 = vand.u32 %v344, 4294901760
        %v735 = vsub.f32 %v344, %v734
        %v736 = vand.u32 %v735, 4294901760
        %737 = vmatmul.mubr.f32.gmra.mrb[0].mxu0 %v736
        %v738 = vpop.f32.mrb[0].mxu0
        %v739 = vadd.f32 %v641, %v738
        %v740 = vpop.f32.mrb[0].mxu0
        %741 = vmatprep.mubr.f32.mxu0 0.0
        %v742 = vand.u32 %v346, 4294901760
        %v743 = vsub.f32 %v346, %v742
        %v744 = vand.u32 %v743, 4294901760
        %745 = vmatmul.mubr.f32.gmra.mrb[0].mxu0 %v744
        %v746 = vpop.f32.mrb[0].mxu0
        %v747 = vadd.f32 %v648, %v746
        %v748 = vpop.f32.mrb[0].mxu0
        %749 = vdwg.mxu0
        %750 = vmatprep.subr.mxu0 0.0
        %v751 = vand.u32 %v253, 4294901760
        %v752 = vsub.f32 %v253, %v751
        %v753 = vand.u32 %v752, 4294901760
        %754 = vmatpush1.msra.mxu0 %v753
        %755 = vmatprep.subr.mxu0 0.0
        %v756 = vand.u32 %v254, 4294901760
        %v757 = vsub.f32 %v254, %v756
        %v758 = vand.u32 %v757, 4294901760
        %759 = vmatpush1.msra.mxu0 %v758
        %760 = vmatprep.subr.mxu0 0.0
        %761 = vmatpush1.msra.mxu0 0.0
        %762 = vmatprep.subr.mxu0 0.0
        %763 = vmatpush1.msra.mxu0 0.0
        %764 = vmatprep.subr.mxu0 0.0
        %765 = vmatpush1.msra.mxu0 0.0
        %766 = vmatprep.subr.mxu0 0.0
        %767 = vmatpush1.msra.mxu0 0.0
        %768 = vmatprep.subr.mxu0 0.0
        %769 = vmatpush1.msra.mxu0 0.0
        %770 = vmatprep.subr.mxu0 0.0
        %771 = vmatpush1.msra.mxu0 0.0
        %772 = vmatprep.subr.mxu0 0.0
        %773 = vmatpush1.msra.mxu0 0.0
        %774 = vmatprep.subr.mxu0 0.0
        %775 = vmatpush1.msra.mxu0 0.0
        %776 = vmatprep.subr.mxu0 0.0
        %777 = vmatpush1.msra.mxu0 0.0
        %778 = vmatprep.subr.mxu0 0.0
        %779 = vmatpush1.msra.mxu0 0.0
        %780 = vmatprep.subr.mxu0 0.0
        %781 = vmatpush1.msra.mxu0 0.0
        %782 = vmatprep.subr.mxu0 0.0
        %783 = vmatpush1.msra.mxu0 0.0
        %784 = vmatprep.subr.mxu0 0.0
        %785 = vmatpush1.msra.mxu0 0.0
        %786 = vmatprep.subr.mxu0 0.0
        %787 = vmatpush1.msra.mxu0 0.0
        %788 = vmatprep.subr.mxu0 0.0
        %789 = vmatpush1.msra.mxu0 0.0
        %790 = vmatprep.subr.mxu0 0.0
        %791 = vmatpush1.msra.mxu0 0.0
        %792 = vmatprep.subr.mxu0 0.0
        %793 = vmatpush1.msra.mxu0 0.0
        %794 = vmatprep.subr.mxu0 0.0
        %795 = vmatpush1.msra.mxu0 0.0
        %796 = vmatprep.subr.mxu0 0.0
        %797 = vmatpush1.msra.mxu0 0.0
        %798 = vmatprep.subr.mxu0 0.0
        %799 = vmatpush1.msra.mxu0 0.0
        %800 = vmatprep.subr.mxu0 0.0
        %801 = vmatpush1.msra.mxu0 0.0
        %802 = vmatprep.subr.mxu0 0.0
        %803 = vmatpush1.msra.mxu0 0.0
        %804 = vmatprep.subr.mxu0 0.0
        %805 = vmatpush1.msra.mxu0 0.0
        %806 = vmatprep.subr.mxu0 0.0
        %807 = vmatpush1.msra.mxu0 0.0
        %808 = vmatprep.subr.mxu0 0.0
        %809 = vmatpush1.msra.mxu0 0.0
        %810 = vmatprep.subr.mxu0 0.0
        %811 = vmatpush1.msra.mxu0 0.0
        %812 = vmatprep.subr.mxu0 0.0
        %813 = vmatpush1.msra.mxu0 0.0
        %814 = vmatprep.subr.mxu0 0.0
        %815 = vmatpush1.msra.mxu0 0.0
        %816 = vmatprep.subr.mxu0 0.0
        %817 = vmatpush1.msra.mxu0 0.0
        %818 = vmatprep.subr.mxu0 0.0
        %819 = vmatpush1.msra.mxu0 0.0
        %820 = vmatprep.mubr.f32.mxu0 0.0
        %v821 = vand.u32 %v340, 4294901760
        %822 = vmatmul.mubr.f32.gmra.mrb[0].mxu0 %v821
        %v823 = vpop.f32.mrb[0].mxu0
        %v824 = vadd.f32 %v723, %v823
        %v825 = vpop.f32.mrb[0].mxu0
        %826 = vmatprep.mubr.f32.mxu0 0.0
        %v827 = vand.u32 %v342, 4294901760
        %828 = vmatmul.mubr.f32.gmra.mrb[0].mxu0 %v827
        %v829 = vpop.f32.mrb[0].mxu0
        %v830 = vadd.f32 %v731, %v829
        %v831 = vpop.f32.mrb[0].mxu0
        %832 = vmatprep.mubr.f32.mxu0 0.0
        %v833 = vand.u32 %v344, 4294901760
        %834 = vmatmul.mubr.f32.gmra.mrb[0].mxu0 %v833
        %v835 = vpop.f32.mrb[0].mxu0
        %v836 = vadd.f32 %v739, %v835
        %v837 = vpop.f32.mrb[0].mxu0
        %838 = vmatprep.mubr.f32.mxu0 0.0
        %v839 = vand.u32 %v346, 4294901760
        %840 = vmatmul.mubr.f32.gmra.mrb[0].mxu0 %v839
        %v841 = vpop.f32.mrb[0].mxu0
        %v842 = vadd.f32 %v747, %v841
        %v843 = vpop.f32.mrb[0].mxu0
        %844 = vdwg.mxu0
        %845 = vmatprep.subr.mxu0 0.0
        %v846 = vand.u32 %v253, 4294901760
        %847 = vmatpush1.msra.mxu0 %v846
        %848 = vmatprep.subr.mxu0 0.0
        %v849 = vand.u32 %v254, 4294901760
        %850 = vmatpush1.msra.mxu0 %v849
        %851 = vmatprep.subr.mxu0 0.0
        %852 = vmatpush1.msra.mxu0 0.0
        %853 = vmatprep.subr.mxu0 0.0
        %854 = vmatpush1.msra.mxu0 0.0
        %855 = vmatprep.subr.mxu0 0.0
        %856 = vmatpush1.msra.mxu0 0.0
        %857 = vmatprep.subr.mxu0 0.0
        %858 = vmatpush1.msra.mxu0 0.0
        %859 = vmatprep.subr.mxu0 0.0
        %860 = vmatpush1.msra.mxu0 0.0
        %861 = vmatprep.subr.mxu0 0.0
        %862 = vmatpush1.msra.mxu0 0.0
        %863 = vmatprep.subr.mxu0 0.0
        %864 = vmatpush1.msra.mxu0 0.0
        %865 = vmatprep.subr.mxu0 0.0
        %866 = vmatpush1.msra.mxu0 0.0
        %867 = vmatprep.subr.mxu0 0.0
        %868 = vmatpush1.msra.mxu0 0.0
        %869 = vmatprep.subr.mxu0 0.0
        %870 = vmatpush1.msra.mxu0 0.0
        %871 = vmatprep.subr.mxu0 0.0
        %872 = vmatpush1.msra.mxu0 0.0
        %873 = vmatprep.subr.mxu0 0.0
        %874 = vmatpush1.msra.mxu0 0.0
        %875 = vmatprep.subr.mxu0 0.0
        %876 = vmatpush1.msra.mxu0 0.0
        %877 = vmatprep.subr.mxu0 0.0
        %878 = vmatpush1.msra.mxu0 0.0
        %879 = vmatprep.subr.mxu0 0.0
        %880 = vmatpush1.msra.mxu0 0.0
        %881 = vmatprep.subr.mxu0 0.0
        %882 = vmatpush1.msra.mxu0 0.0
        %883 = vmatprep.subr.mxu0 0.0
        %884 = vmatpush1.msra.mxu0 0.0
        %885 = vmatprep.subr.mxu0 0.0
        %886 = vmatpush1.msra.mxu0 0.0
        %887 = vmatprep.subr.mxu0 0.0
        %888 = vmatpush1.msra.mxu0 0.0
        %889 = vmatprep.subr.mxu0 0.0
        %890 = vmatpush1.msra.mxu0 0.0
        %891 = vmatprep.subr.mxu0 0.0
        %892 = vmatpush1.msra.mxu0 0.0
        %893 = vmatprep.subr.mxu0 0.0
        %894 = vmatpush1.msra.mxu0 0.0
        %895 = vmatprep.subr.mxu0 0.0
        %896 = vmatpush1.msra.mxu0 0.0
        %897 = vmatprep.subr.mxu0 0.0
        %898 = vmatpush1.msra.mxu0 0.0
        %899 = vmatprep.subr.mxu0 0.0
        %900 = vmatpush1.msra.mxu0 0.0
        %901 = vmatprep.subr.mxu0 0.0
        %902 = vmatpush1.msra.mxu0 0.0
        %903 = vmatprep.subr.mxu0 0.0
        %904 = vmatpush1.msra.mxu0 0.0
        %905 = vmatprep.subr.mxu0 0.0
        %906 = vmatpush1.msra.mxu0 0.0
        %907 = vmatprep.subr.mxu0 0.0
        %908 = vmatpush1.msra.mxu0 0.0
        %909 = vmatprep.subr.mxu0 0.0
        %910 = vmatpush1.msra.mxu0 0.0
        %911 = vmatprep.mubr.f32.mxu0 0.0
        %v912 = vand.u32 %v340, 4294901760
        %913 = vmatmul.mubr.f32.gmra.mrb[0].mxu0 %v912
        %v914 = vpop.f32.mrb[0].mxu0
        %v915 = vadd.f32 %v824, %v914
        %v916 = vpop.f32.mrb[0].mxu0
        %917 = vmatprep.mubr.f32.mxu0 0.0
        %v918 = vand.u32 %v342, 4294901760
        %919 = vmatmul.mubr.f32.gmra.mrb[0].mxu0 %v918
        %v920 = vpop.f32.mrb[0].mxu0
        %v921 = vadd.f32 %v830, %v920
        %v922 = vpop.f32.mrb[0].mxu0
        %923 = vmatprep.mubr.f32.mxu0 0.0
        %v924 = vand.u32 %v344, 4294901760
        %925 = vmatmul.mubr.f32.gmra.mrb[0].mxu0 %v924
        %v926 = vpop.f32.mrb[0].mxu0
        %v927 = vadd.f32 %v836, %v926
        %v928 = vpop.f32.mrb[0].mxu0
        %929 = vmatprep.mubr.f32.mxu0 0.0
        %v930 = vand.u32 %v346, 4294901760
        %931 = vmatmul.mubr.f32.gmra.mrb[0].mxu0 %v930
        %v932 = vpop.f32.mrb[0].mxu0
        %v933 = vadd.f32 %v842, %v932
        %v934 = vpop.f32.mrb[0].mxu0
        %935 = vdwg.mxu0
        %vm936 = vcmask 64512
        %937 = vst.msk [vmem:[%s233] sm:$0xff] %vm936, %v915
        %938 = vst.msk [vmem:[%s233 + $0x10] sm:$0xff] %vm936, %v921
        %939 = vst.msk [vmem:[%s233 + $0x20] sm:$0xff] %vm936, %v927
        %940 = vst.msk [vmem:[%s233 + $0x30] sm:$0xff] %vm936, %v933
        %945 = vrot.lane.b32.xlu0 %v915, 120
        %v946 = vpop.permute.xlu0 %945
        %947 = vrot.lane.b32.xlu0 %v921, 120
        %v948 = vpop.permute.xlu0 %947
        %949 = vrot.lane.b32.xlu0 %v927, 120
        %v950 = vpop.permute.xlu0 %949
        %951 = vrot.lane.b32.xlu0 %v933, 120
        %v952 = vpop.permute.xlu0 %951
        %s957 = scalar_lea.vmem %s233, 8 [#allocation7]
        %958 = vst.msk [vmem:[%s957] sm:$0xff] %vm936, %v946
        %959 = vst.msk [vmem:[%s957 + $0x10] sm:$0xff] %vm936, %v948
        %960 = vst.msk [vmem:[%s957 + $0x20] sm:$0xff] %vm936, %v950
        %961 = vst.msk [vmem:[%s957 + $0x30] sm:$0xff] %vm936, %v952
        %s962 = sand.u32 %s124, 1
        %s963 = scalar_lea.sflag [#allocation4], %s962
        %s964 = sand.u32 %s124, 1
        %s965 = smul.addr %s964, 64
        %s966 = scalar_lea.vmem [#allocation7], %s965
        // Predicated region
        $region37: #{tpu_custom_call.1} parent=27 // pred_check
          %p967 = pneg %p134
        $region38: #{tpu_custom_call.1} parent=27 // pred_check_branch
          %969 = sbr.rel (%p967) target = $region40
        $region39: #{tpu_custom_call.1} parent=27 // pred_region
          #allocation9 [shape = 'u32[6]{0}', space=smem, size = 0x18, scoped, tag = 'DMA stride descriptor']
          %s970 = smul.u32 4, %s28
          %s972 = ssub.s32 1024, 1024
          %973 = vsyncadd %s963, %s972
          %s974 = sadd.s32 %s31, %s30
          %s975 = smul.addr %s29, 2
          %s976 = sadd.s32 %s974, %s975
          %s977 = smul.addr %s970, 4
          %s978 = sadd.s32 %s976, %s977
          %s979 = smul.addr %s27, 16
          %s980 = sadd.s32 %s978, %s979
          %s981 = smul.addr %s980, 128
          %s982 = scalar_lea.hbm %s2, %s981
          %s984 = sshll.u32 1, 14
          %s985 = sxor.u32 4294967295, %s984
          %s988 = sshll.u32 7, 18
          %s989 = sxor.u32 4294967295, %s988
          %s990 = sand.u32 0, %s989
          %s992 = sor.u32 %s990, 0
          %s994 = sshll.u32 3, 24
          %s995 = sxor.u32 4294967295, %s994
          %s996 = sand.u32 %s992, %s995
          %s998 = sor.u32 %s996, 0
          %s999 = sshll.u32 %s966, 4
          %s1000 = int_to_ptr.vmem [resolvable:$true] %s999
          %1006 = sst [smem:[#allocation9]] 256
          %s1007 = scalar_lea.smem [#allocation9], 1
          %1008 = sst [smem:[%s1007]] 512
          %s1009 = scalar_lea.smem [#allocation9], 2
          %1010 = sst [smem:[%s1009]] 2
          %s1011 = scalar_lea.smem [#allocation9], 3
          %1012 = sst [smem:[%s1011]] 128
          %s1013 = scalar_lea.smem [#allocation9], 4
          %1014 = sst [smem:[%s1013]] 128
          %s1015 = scalar_lea.smem [#allocation9], 5
          %1016 = sst [smem:[%s1015]] 8
          %1018 = dma.general %s1000, 1024, %s982, %s963, [#allocation8], [#allocation9], %s998, 0
        $region40: #{tpu_custom_call.1} parent=27 // pred_fallthru
          _
      $region28: #{tpu_custom_call.1} parent=5 // pred_fallthru
        _
      %p1019 = scmp.le.s32.totalorder 2, %s15
      // Predicated region
      $region41: #{tpu_custom_call.1} parent=5 // pred_check
        %p1020 = pneg %p1019
      $region42: #{tpu_custom_call.1} parent=5 // pred_check_branch
        %1022 = sbr.rel (%p1020) target = $region44
      $region43: #{tpu_custom_call.1} parent=5 // pred_region
        %s1023 = ssub.s32 %s15, 2
        // Predicated region
        $region45: #{tpu_custom_call.1} parent=43 // pred_check
          %p1024 = pneg %p140
        $region46: #{tpu_custom_call.1} parent=43 // pred_check_branch
          %1026 = sbr.rel (%p1024) target = $region48
        $region47: #{tpu_custom_call.1} parent=43 // pred_region
          %s1027 = sand.u32 %s125, 1
          %s1028 = scalar_lea.sflag [#allocation4], %s1027
          %s1029 = sand.u32 %s125, 1
          %s1030 = smul.addr %s1029, 64
          %s1031 = scalar_lea.vmem [#allocation7], %s1030
          %1032 = dma.done %s1028, 1024
        $region48: #{tpu_custom_call.1} parent=43 // pred_fallthru
          _
      $region44: #{tpu_custom_call.1} parent=5 // pred_fallthru
        _
    $region6: #{tpu_custom_call.1} parent=1 // loop_footer
      %s19 = sadd.s32 1, %s15
    $region7: #{tpu_custom_call.1} parent=1 // loop_footer_branch
      %14 = sbr.rel target = $region3
    $region8: #{tpu_custom_call.1} parent=1 // loop_exit
      _
    %1033 = vsyncpa [#allocation3], 1
    %s1034 = scalar_lea.sflag [#allocation3], 1
    %1035 = vsyncpa %s1034, 1
    %1036 = vsyncpa [#allocation6], 1
    %1037 = vsyncpa [#allocation4], 1
    %s1038 = scalar_lea.sflag [#allocation4], 1
    %1039 = vsyncpa %s1038, 1

</llo_original>
